<compile_context>
chip_gen: v6e
topology: v6e:2x2x1
jax: 0.10.0
libtpu: 0.0.40
codegen_flags: <defaults>
</compile_context>

<pallas_src>
import functools

import jax
import jax.numpy as jnp
import numpy as np
from jax import lax
from jax.experimental import pallas as pl
from jax.experimental.pallas import tpu as pltpu


def pa_kernel(x_ref, wq_ref, bq_ref, wkv_ref, bkv_ref, g_ref,
              out_ref, k_ref, v_ref, *, n_real):
    """One (batch, query-tile) grid step.

    x_ref:    (1, C, Npad)   x in matmul dtype (K/V/Q/residual source, resident
                             across all query tiles of this batch)
    wq_ref:   (C8P, C)       zero-padded query projection (matmul dtype)
    bq_ref:   (C8P, 1)       zero-padded query bias (f32)
    wkv_ref:  (C8P+C, C)     packed key+value projection (matmul dtype)
    bkv_ref:  (C8P+C, 1)     packed key+value bias (f32)
    g_ref:    (1,) SMEM      gamma
    out_ref:  (1, C, tq)     output tile (lane-dense)
    k_ref:    (C8P, Npad)    VMEM scratch: cached key projection (matmul dtype)
    v_ref:    (C, Npad)      VMEM scratch: cached value projection (matmul dtype)
    n_real:   static int     number of real (unpadded) spatial positions
    """
    c8p = wq_ref.shape[0]
    tq = out_ref.shape[2]
    n_pad = x_ref.shape[2]
    mm_dtype = wq_ref.dtype

    # ---- K/V projection: computed once per batch, cached across query tiles.
    @pl.when(pl.program_id(1) == 0)
    def _():
        kv = jnp.dot(wkv_ref[...], x_ref[0].astype(mm_dtype),
                     preferred_element_type=jnp.float32) + bkv_ref[...]
        k_ref[...] = kv[:c8p].astype(mm_dtype)     # (C8P, Npad)
        v_ref[...] = kv[c8p:].astype(mm_dtype)     # (C,   Npad)

    # ---- Query tile: slice from the resident full block (no 2nd HBM stream).
    qi = pl.multiple_of(pl.program_id(1) * tq, 128)
    x_q = x_ref[0, :, pl.ds(qi, tq)]                               # (C, tq)

    q = jnp.dot(wq_ref[...], x_q.astype(mm_dtype),
                preferred_element_type=jnp.float32) + bq_ref[...]  # (C8P, tq) f32

    # ---- energy^T[j, i] = <k_j, q_i> -> (Npad, tq). Keys on sublanes, queries
    # on lanes, so the softmax stats below come out lane-dense. Low-precision
    # operands, f32 accumulation (single-pass MXU).
    energy_t = lax.dot_general(k_ref[...], q.astype(mm_dtype),
                               (((0,), (0,)), ((), ())),
                               preferred_element_type=jnp.float32)  # (Npad, tq)

    # Mask padded key positions (only emitted when N was actually padded).
    if n_real < n_pad:
        key_idx = lax.broadcasted_iota(jnp.int32, (n_pad, tq), 0)
        energy_t = jnp.where(key_idx < n_real, energy_t, -jnp.inf)

    # ---- Softmax over keys (axis 0), f32; normalization deferred to output.
    m = jnp.max(energy_t, axis=0, keepdims=True)      # (1, tq)
    p = jnp.exp(energy_t - m)                         # (Npad, tq)
    l = jnp.sum(p, axis=0, keepdims=True)             # (1, tq)
    inv_l = pl.reciprocal(l, approx=True)             # (1, tq)

    # ---- out[c, i] = (sum_j v[c, j] * p[j, i]) / l[i] -> (C, tq), lane-dense.
    out = lax.dot_general(v_ref[...], p.astype(mm_dtype),
                          (((1,), (0,)), ((), ())),
                          preferred_element_type=jnp.float32)       # (C, tq)
    out = out * inv_l

    gamma = g_ref[0]
    out_ref[0] = (gamma * out + x_q.astype(jnp.float32)).astype(out_ref.dtype)


def _round_up(a, b):
    return ((a + b - 1) // b) * b


def _tiling(n, tq_max):
    """Lane-dense query tiling: tq is always a multiple of 128; N is padded up
    to a multiple of tq (padded keys are masked inside the kernel)."""
    tq = max(128, (tq_max // 128) * 128)
    tq = min(tq, _round_up(n, 128))
    n_pad = _round_up(n, tq)
    return n_pad, tq, n_pad // tq


def pa_module(x, wq, bq, wk, bk, wv, bv, gamma, *,
              matmul_dtype=jnp.bfloat16, tq_max=256,
              vmem_limit_bytes=48 * 1024 * 1024):
    """PAModule forward.

    x:      (bs, C, H, W) float32 (native NCHW).
    wq, wk: (C//8, C); wv: (C, C)   -- torch Conv2d 1x1 weights[:, :, 0, 0].
    bq, bk: (C//8,);   bv: (C,);    gamma: (1,).

    Per-generation tuning: defaults (tq_max=256, 48 MiB) keep VMEM headroom on
    v7x (64 MiB physical); on v6e/v5e prefer tq_max=512 and
    vmem_limit_bytes ~ 96 MiB.
    """
    bs, c, h, w = x.shape
    n = h * w
    c8 = wq.shape[0]
    c8p = _round_up(max(c8, 1), 8)   # pad Q/K output channels to sublane multiple

    n_pad, tq, n_qt = _tiling(n, tq_max)

    f32 = jnp.float32
    # Zero-pad Q/K projections (padded channels contribute nothing to the
    # energy); pack K and V into a single matmul.
    wq_p = jnp.zeros((c8p, c), f32).at[:c8].set(wq.astype(f32)).astype(matmul_dtype)
    wk_p = jnp.zeros((c8p, c), f32).at[:c8].set(wk.astype(f32))
    wkv = jnp.concatenate([wk_p, wv.astype(f32)], axis=0).astype(matmul_dtype)
    bq_p = jnp.zeros((c8p, 1), f32).at[:c8, 0].set(bq.astype(f32))
    bkv = jnp.concatenate(
        [jnp.zeros((c8p,), f32).at[:c8].set(bk.astype(f32)), bv.astype(f32)],
        axis=0).reshape(c8p + c, 1)

    # Channels-on-sublanes / pixels-on-lanes, stored in the matmul dtype
    # (halves HBM traffic + resident VMEM on the default bf16 path); pad the
    # pixel axis to a lane-dense multiple of tq.
    x_flat = x.reshape(bs, c, n).astype(matmul_dtype)
    if n_pad != n:
        x_flat = jnp.pad(x_flat, ((0, 0), (0, 0), (0, n_pad - n)))
    gamma = jnp.asarray(gamma).reshape(1).astype(f32)

    kernel = functools.partial(pa_kernel, n_real=n)

    out_flat = pl.pallas_call(
        kernel,
        out_shape=jax.ShapeDtypeStruct((bs, c, n_pad), f32),
        grid_spec=pltpu.PrefetchScalarGridSpec(
            num_scalar_prefetch=0,
            grid=(bs, n_qt),
            in_specs=[
                pl.BlockSpec((1, c, n_pad), lambda b, i: (b, 0, 0)),    # x (full)
                pl.BlockSpec((c8p, c), lambda b, i: (0, 0)),            # Wq (padded)
                pl.BlockSpec((c8p, 1), lambda b, i: (0, 0)),            # bq (padded)
                pl.BlockSpec((c8p + c, c), lambda b, i: (0, 0)),        # W_kv packed
                pl.BlockSpec((c8p + c, 1), lambda b, i: (0, 0)),        # b_kv packed
                pl.BlockSpec(memory_space=pltpu.MemorySpace.SMEM),      # gamma
            ],
            out_specs=pl.BlockSpec((1, c, tq), lambda b, i: (b, 0, i)),
            scratch_shapes=[
                pltpu.VMEM((c8p, n_pad), matmul_dtype),   # cached K projection
                pltpu.VMEM((c, n_pad), matmul_dtype),     # cached V projection
            ],
        ),
        compiler_params=pltpu.CompilerParams(
            # Batch is "parallel" (megacore shards it); the query-tile axis is
            # "arbitrary" because the K/V scratch is carried across it.
            dimension_semantics=("parallel", "arbitrary"),
            vmem_limit_bytes=vmem_limit_bytes,
        ),
    )(x_flat, wq_p, bq_p, wkv, bkv, gamma)

    return out_flat[:, :, :n].reshape(bs, c, h, w)


def pa_module_ref(x, wq, bq, wk, bk, wv, bv, gamma):
    """Pure-JAX (f32) reference mirroring the PyTorch forward."""
    bs, c, h, w = x.shape
    n = h * w
    xf = x.reshape(bs, c, n).astype(jnp.float32)
    q = jnp.einsum("oc,bcn->bon", wq, xf) + bq[None, :, None]   # (bs, C8, N)
    k = jnp.einsum("oc,bcn->bon", wk, xf) + bk[None, :, None]   # (bs, C8, N)
    v = jnp.einsum("oc,bcn->bon", wv, xf) + bv[None, :, None]   # (bs, C, N)
    energy = jnp.einsum("bci,bcj->bij", q, k)                   # i = query, j = key
    attn = jax.nn.softmax(energy, axis=-1)
    out = jnp.einsum("bcj,bij->bci", v, attn)                   # (bs, C, N)
    out = gamma[0] * out + xf
    return out.reshape(bs, c, h, w)


def _make_inputs(key, bs, c, h, w):
    c8 = c // 8
    kx, kq, kbq, kk, kbk, kv_, kbv = jax.random.split(key, 7)
    scale = 1.0 / np.sqrt(c)
    x = jax.random.normal(kx, (bs, c, h, w), dtype=jnp.float32)
    wq = jax.random.normal(kq, (c8, c), dtype=jnp.float32) * scale
    bq = jax.random.normal(kbq, (c8,), dtype=jnp.float32) * scale
    wk = jax.random.normal(kk, (c8, c), dtype=jnp.float32) * scale
    bk = jax.random.normal(kbk, (c8,), dtype=jnp.float32) * scale
    wv = jax.random.normal(kv_, (c, c), dtype=jnp.float32) * scale
    bv = jax.random.normal(kbv, (c,), dtype=jnp.float32) * scale
    # Module inits gamma to 0 (identity residual); use a nonzero value so the
    # attention path is actually exercised/verified.
    gamma = jnp.array([0.5], dtype=jnp.float32)
    return x, wq, bq, wk, bk, wv, bv, gamma


if __name__ == "__main__":
    # Case 1: bs=2, C=16, 8x8 (N=64 < 128 -> exercises the padded-key mask).
    args1 = _make_inputs(jax.random.PRNGKey(0), 2, 16, 8, 8)
    ref1 = pa_module_ref(*args1)

    # f32 matmul path: tight structural check (approx-reciprocal tolerance).
    out32 = jax.block_until_ready(pa_module(*args1, matmul_dtype=jnp.float32))
    np.testing.assert_allclose(np.asarray(out32), np.asarray(ref1),
                               rtol=1e-2, atol=1e-2)
    assert out32.shape == args1[0].shape

    # bf16 matmul path (default fast path): loose numeric check — bf16
    # operands / bf16-stored x are inherent to the fast path, not a bug.
    outbf = jax.block_until_ready(pa_module(*args1))
    np.testing.assert_allclose(np.asarray(outbf), np.asarray(ref1),
                               rtol=5e-2, atol=2e-1)
    assert outbf.shape == args1[0].shape

    # Case 2: bs=2, C=16, 16x16 (N=256) with tq_max=128 -> 2 query tiles per
    # batch, exercising the cached-KV path across the "arbitrary" grid axis.
    args2 = _make_inputs(jax.random.PRNGKey(1), 2, 16, 16, 16)
    ref2 = pa_module_ref(*args2)
    out32b = jax.block_until_ready(
        pa_module(*args2, matmul_dtype=jnp.float32, tq_max=128))
    np.testing.assert_allclose(np.asarray(out32b), np.asarray(ref2),
                               rtol=1e-2, atol=1e-2)
    assert out32b.shape == args2[0].shape

    print("KERNEL_OK")
</pallas_src>

<mosaic_0001>
module attributes {stable_mosaic.version = 11 : i64} {
  func.func @pa_kernel(%arg0: i32, %arg1: i32, %arg2: memref<1x16x128xf32, #tpu.memory_space<vmem>>, %arg3: memref<8x16xf32, #tpu.memory_space<vmem>>, %arg4: memref<8x1xf32, #tpu.memory_space<vmem>>, %arg5: memref<24x16xf32, #tpu.memory_space<vmem>>, %arg6: memref<24x1xf32, #tpu.memory_space<vmem>>, %arg7: memref<1xf32, #tpu.memory_space<smem>>, %arg8: memref<1x16x128xf32, #tpu.memory_space<vmem>>, %arg9: memref<8x128xf32, #tpu.memory_space<vmem>>, %arg10: memref<16x128xf32, #tpu.memory_space<vmem>>) attributes {dimension_semantics = [#tpu.dimension_semantics<parallel>, #tpu.dimension_semantics<arbitrary>], iteration_bounds = array<i64: 2, 1>, scalar_prefetch = 0 : i64, scratch_operands = 2 : i64, tpu.core_type = #tpu.core_type<tc>, window_params = [{transform_indices = @transform_0, window_bounds = array<i64: 1, 16, 128>}, {pipeline_mode = #tpu.pipeline_mode<synchronous>, transform_indices = @transform_1, window_bounds = array<i64: 8, 16>}, {pipeline_mode = #tpu.pipeline_mode<synchronous>, transform_indices = @transform_2, window_bounds = array<i64: 8, 1>}, {pipeline_mode = #tpu.pipeline_mode<synchronous>, transform_indices = @transform_3, window_bounds = array<i64: 24, 16>}, {pipeline_mode = #tpu.pipeline_mode<synchronous>, transform_indices = @transform_4, window_bounds = array<i64: 24, 1>}, {transform_indices = @transform_5, window_bounds = array<i64: 1>}, {transform_indices = @transform_6, window_bounds = array<i64: 1, 16, 128>}]} {
    %c0_i32 = arith.constant 0 : i32
    %0 = arith.cmpi eq, %arg1, %c0_i32 : i32
    %1 = arith.extui %0 : i1 to i32
    %c0_i32_0 = arith.constant 0 : i32
    %2 = arith.cmpi ne, %1, %c0_i32_0 : i32
    scf.if %2 {
      %c0_19 = arith.constant 0 : index
      %c0_20 = arith.constant 0 : index
      %39 = vector.load %arg5[%c0_19, %c0_20] : memref<24x16xf32, #tpu.memory_space<vmem>>, vector<24x16xf32>
      %c0_21 = arith.constant 0 : index
      %c0_22 = arith.constant 0 : index
      %c0_23 = arith.constant 0 : index
      %40 = vector.load %arg2[%c0_21, %c0_22, %c0_23] : memref<1x16x128xf32, #tpu.memory_space<vmem>>, vector<1x16x128xf32>
      %41 = vector.shape_cast %40 : vector<1x16x128xf32> to vector<16x128xf32>
      %cst_24 = arith.constant dense<0.000000e+00> : vector<24x128xf32>
      %42 = tpu.matmul %39, %41, %cst_24 {dimension_numbers = #tpu.dot_dimension_numbers<[1], [0], [0], [1], [0, 0, 1, 1], [], []>} : vector<24x16xf32>, vector<16x128xf32>, vector<24x128xf32> -> vector<24x128xf32>
      %c0_25 = arith.constant 0 : index
      %c0_26 = arith.constant 0 : index
      %43 = vector.load %arg6[%c0_25, %c0_26] : memref<24x1xf32, #tpu.memory_space<vmem>>, vector<24x1xf32>
      %44 = vector.broadcast %43 : vector<24x1xf32> to vector<24x128xf32>
      %45 = arith.addf %42, %44 : vector<24x128xf32>
      %46 = vector.extract_strided_slice %45 {offsets = [0, 0], sizes = [8, 128], strides = [1, 1]} : vector<24x128xf32> to vector<8x128xf32>
      %c0_27 = arith.constant 0 : index
      %c0_28 = arith.constant 0 : index
      %47 = vector.load %arg9[%c0_27, %c0_28] : memref<8x128xf32, #tpu.memory_space<vmem>>, vector<8x128xf32>
      tpu.vector_store %arg9[%c0_27, %c0_28], %46 {strides = array<i32>} : memref<8x128xf32, #tpu.memory_space<vmem>>, vector<8x128xf32>,
      %48 = vector.extract_strided_slice %45 {offsets = [8, 0], sizes = [16, 128], strides = [1, 1]} : vector<24x128xf32> to vector<16x128xf32>
      %c0_29 = arith.constant 0 : index
      %c0_30 = arith.constant 0 : index
      %49 = vector.load %arg10[%c0_29, %c0_30] : memref<16x128xf32, #tpu.memory_space<vmem>>, vector<16x128xf32>
      tpu.vector_store %arg10[%c0_29, %c0_30], %48 {strides = array<i32>} : memref<16x128xf32, #tpu.memory_space<vmem>>, vector<16x128xf32>,
    } else {
    }
    %c128_i32 = arith.constant 128 : i32
    %3 = arith.muli %arg1, %c128_i32 : i32
    %4 = tpu.assume_multiple %3, 128 : i32
    %c0 = arith.constant 0 : index
    %c0_1 = arith.constant 0 : index
    %5 = arith.index_cast %4 : i32 to index
    %6 = vector.load %arg2[%c0, %c0_1, %5] : memref<1x16x128xf32, #tpu.memory_space<vmem>>, vector<1x16x128xf32>
    %7 = vector.shape_cast %6 : vector<1x16x128xf32> to vector<16x128xf32>
    %c0_2 = arith.constant 0 : index
    %c0_3 = arith.constant 0 : index
    %8 = vector.load %arg3[%c0_2, %c0_3] : memref<8x16xf32, #tpu.memory_space<vmem>>, vector<8x16xf32>
    %cst = arith.constant dense<0.000000e+00> : vector<8x128xf32>
    %9 = tpu.matmul %8, %7, %cst {dimension_numbers = #tpu.dot_dimension_numbers<[1], [0], [0], [1], [0, 0, 1, 1], [], []>} : vector<8x16xf32>, vector<16x128xf32>, vector<8x128xf32> -> vector<8x128xf32>
    %c0_4 = arith.constant 0 : index
    %c0_5 = arith.constant 0 : index
    %10 = vector.load %arg4[%c0_4, %c0_5] : memref<8x1xf32, #tpu.memory_space<vmem>>, vector<8x1xf32>
    %11 = vector.broadcast %10 : vector<8x1xf32> to vector<8x128xf32>
    %12 = arith.addf %9, %11 : vector<8x128xf32>
    %c0_6 = arith.constant 0 : index
    %c0_7 = arith.constant 0 : index
    %13 = vector.load %arg9[%c0_6, %c0_7] : memref<8x128xf32, #tpu.memory_space<vmem>>, vector<8x128xf32>
    %cst_8 = arith.constant dense<0.000000e+00> : vector<128x128xf32>
    %14 = tpu.matmul %13, %12, %cst_8 {dimension_numbers = #tpu.dot_dimension_numbers<[0], [0], [1], [1], [0, 1, 1, 1], [], []>} : vector<8x128xf32>, vector<8x128xf32>, vector<128x128xf32> -> vector<128x128xf32>
    %15 = tpu.iota {dimensions = array<i32: 0>} : vector<128x128xi32>
    %c64_i32 = arith.constant 64 : i32
    %16 = vector.broadcast %c64_i32 : i32 to vector<128x128xi32>
    %17 = arith.cmpi slt, %15, %16 : vector<128x128xi32>
    %cst_9 = arith.constant 0xFF800000 : f32
    %18 = vector.broadcast %cst_9 : f32 to vector<128x128xf32>
    %19 = arith.select %17, %14, %18 : vector<128x128xi1>, vector<128x128xf32>
    %cst_10 = arith.constant dense<0xFF800000> : vector<128xf32>
    %20 = vector.multi_reduction <maximumf>, %19, %cst_10 [0] : vector<128x128xf32> to vector<128xf32>
    %21 = vector.shape_cast %20 : vector<128xf32> to vector<1x128xf32>
    %22 = vector.broadcast %21 : vector<1x128xf32> to vector<128x128xf32>
    %23 = arith.subf %19, %22 : vector<128x128xf32>
    %24 = math.exp %23 : vector<128x128xf32>
    %cst_11 = arith.constant dense<0.000000e+00> : vector<128xf32>
    %25 = vector.multi_reduction <add>, %24, %cst_11 [0] : vector<128x128xf32> to vector<128xf32>
    %26 = vector.shape_cast %25 : vector<128xf32> to vector<1x128xf32>
    %27 = tpu.reciprocal %26 {approx = true} : vector<1x128xf32> -> vector<1x128xf32>
    %c0_12 = arith.constant 0 : index
    %c0_13 = arith.constant 0 : index
    %28 = vector.load %arg10[%c0_12, %c0_13] : memref<16x128xf32, #tpu.memory_space<vmem>>, vector<16x128xf32>
    %cst_14 = arith.constant dense<0.000000e+00> : vector<16x128xf32>
    %29 = tpu.matmul %28, %24, %cst_14 {dimension_numbers = #tpu.dot_dimension_numbers<[1], [0], [0], [1], [0, 0, 1, 1], [], []>} : vector<16x128xf32>, vector<128x128xf32>, vector<16x128xf32> -> vector<16x128xf32>
    %30 = vector.broadcast %27 : vector<1x128xf32> to vector<16x128xf32>
    %31 = arith.mulf %29, %30 : vector<16x128xf32>
    %c0_15 = arith.constant 0 : index
    %32 = memref.load %arg7[%c0_15] : memref<1xf32, #tpu.memory_space<smem>>
    %33 = vector.broadcast %32 : f32 to vector<16x128xf32>
    %34 = arith.mulf %33, %31 : vector<16x128xf32>
    %35 = arith.addf %34, %7 : vector<16x128xf32>
    %c0_16 = arith.constant 0 : index
    %c0_17 = arith.constant 0 : index
    %c0_18 = arith.constant 0 : index
    %36 = vector.load %arg8[%c0_16, %c0_17, %c0_18] : memref<1x16x128xf32, #tpu.memory_space<vmem>>, vector<1x16x128xf32>
    %37 = vector.shape_cast %36 : vector<1x16x128xf32> to vector<16x128xf32>
    %38 = vector.shape_cast %35 : vector<16x128xf32> to vector<1x16x128xf32>
    tpu.vector_store %arg8[%c0_16, %c0_17, %c0_18], %38 {strides = array<i32>} : memref<1x16x128xf32, #tpu.memory_space<vmem>>, vector<1x16x128xf32>,
    return
  }
  func.func @transform_0(%arg0: i32, %arg1: i32) -> (i32, i32, i32) {
    %c0_i32 = arith.constant 0 : i32
    %c0_i32_0 = arith.constant 0 : i32
    %c0_i32_1 = arith.constant 0 : i32
    return %arg0, %c0_i32, %c0_i32_0 : i32, i32, i32
  }
  func.func @transform_1(%arg0: i32, %arg1: i32) -> (i32, i32) {
    %c0_i32 = arith.constant 0 : i32
    %c0_i32_0 = arith.constant 0 : i32
    %c0_i32_1 = arith.constant 0 : i32
    return %c0_i32, %c0_i32_0 : i32, i32
  }
  func.func @transform_2(%arg0: i32, %arg1: i32) -> (i32, i32) {
    %c0_i32 = arith.constant 0 : i32
    %c0_i32_0 = arith.constant 0 : i32
    %c0_i32_1 = arith.constant 0 : i32
    return %c0_i32, %c0_i32_0 : i32, i32
  }
  func.func @transform_3(%arg0: i32, %arg1: i32) -> (i32, i32) {
    %c0_i32 = arith.constant 0 : i32
    %c0_i32_0 = arith.constant 0 : i32
    %c0_i32_1 = arith.constant 0 : i32
    return %c0_i32, %c0_i32_0 : i32, i32
  }
  func.func @transform_4(%arg0: i32, %arg1: i32) -> (i32, i32) {
    %c0_i32 = arith.constant 0 : i32
    %c0_i32_0 = arith.constant 0 : i32
    %c0_i32_1 = arith.constant 0 : i32
    return %c0_i32, %c0_i32_0 : i32, i32
  }
  func.func @transform_5(%arg0: i32, %arg1: i32) -> i32 {
    %c0_i32 = arith.constant 0 : i32
    %c0_i32_0 = arith.constant 0 : i32
    return %c0_i32 : i32
  }
  func.func @transform_6(%arg0: i32, %arg1: i32) -> (i32, i32, i32) {
    %c0_i32 = arith.constant 0 : i32
    %c0_i32_0 = arith.constant 0 : i32
    return %arg0, %c0_i32, %arg1 : i32, i32, i32
  }
}

</mosaic_0001>

<llo_original>
// kernel: tpu_custom_call.1
$region0: #{tpu_custom_call.1}
  #allocation0 [shape = 'u32[]', space=smem, size = 0x4, offset = 0x4, fixed_abs, tag = 'smem constant byte address 0x4 - core index']
  #allocation1 [shape = 'u32[144,128]{1,0:T(1,128)}', space=vmem, size = 0x12000, scoped, tag = 'internal scratch']
  #allocation2 [shape = 'f32[8,128]{1,0:T(8,128)}', space=vmem, size = 0x1000, scoped, tag = 'scratch operand']
  #allocation3 [shape = 'f32[16,128]{1,0:T(8,128)}', space=vmem, size = 0x2000, scoped, tag = 'scratch operand']
  #allocation4 [shape = 'f32[1]{0:T(128)S(6)}', space=smem, size = 0x200, scoped, tag = 'scoped memory for tpu_custom_call.1']
  %s0 = inlined_call_operand.vmem [shape: f32[2,16,128], index: 0, kind: input, shape index: {}]
  %s1 = inlined_call_operand.vmem [shape: f32[8,16], index: 1, kind: input, shape index: {}]
  %s2 = inlined_call_operand.vmem [shape: f32[8,1], index: 2, kind: input, shape index: {}]
  %s3 = inlined_call_operand.vmem [shape: f32[24,16], index: 3, kind: input, shape index: {}]
  %s4 = inlined_call_operand.vmem [shape: f32[24,1], index: 4, kind: input, shape index: {}]
  %s5 = inlined_call_operand.<no memory space> [shape: f32[1], index: 5, kind: input, shape index: {}]
  %s6 = inlined_call_operand.hbm [shape: f32[2,16,128], index: 6, kind: output, shape index: {}]
  %s7 = sld [smem:[#allocation0]]
  $region61: #{tpu_custom_call.1} parent=0
    _
  %s9 = ssub.s32 1, %s7
  %s10 = scalar_select 0, %s9, %s7
  %11 = sst [smem:[#allocation4]] %s5
  $region1: #{tpu_custom_call.1} parent=0
    #allocation5 [shape = 'u8[16384]{0}', space=vmem, size = 0x4000, scoped, tag = 'output window, operand 0']
    #allocation6 [shape = 's32[2]{0}', space=sflag, size = 0x8, scoped, tag = 'scoped memory for tpu_custom_call.1']
    %12 = vsyncpa [#allocation6], 0
    %s13 = scalar_lea.sflag [#allocation6], 1
    %14 = vsyncpa %s13, 0
    loop: start=0, step=1, limit=4
    $region2: #{tpu_custom_call.1} parent=1 // loop_pre_header
      _
    $region3: #{tpu_custom_call.1} parent=1 // loop_header
      %s16 = sphi 0, %s20
      %p17 = scmp.ge.s32.totalorder %s16, 4
      %s23 = sphi 0, %s35
      %s24 = sphi 0, %s31
      %s25 = sphi 0, %s23
      %s26 = sphi 0, %s24
      %s27 = sphi 0, %s25
      %s28 = sphi 0, %s26
      %s38 = sphi 0, %s40
      %s41 = sphi 0, %s38
      %s42 = sphi 0, %s41
      %s58 = sphi 0, %s42
      %s62 = sphi 0, %s62
      %s64 = sphi 0, %s62
      %s65 = sphi 0, %s64
      %s79 = sphi 0, %s65
      %s83 = sphi 0, %s83
      %s85 = sphi 0, %s83
      %s86 = sphi 0, %s85
      %s100 = sphi 0, %s86
      %s104 = sphi 0, %s104
      %s106 = sphi 0, %s104
      %s107 = sphi 0, %s106
      %s121 = sphi 0, %s107
      %s125 = sphi 0, %s125
      %s127 = sphi 0, %s125
      %s128 = sphi 0, %s127
      %s142 = sphi 0, %s128
      %s146 = sphi 0, %s146
      %s148 = sphi 0, %s146
      %s149 = sphi 0, %s148
      %s163 = sphi 0, %s149
      %s171 = sphi 0, %s173
      %s174 = sphi 0, %s171
      %s175 = sphi 0, %s174
      %s191 = sphi 0, %s175
    $region4: #{tpu_custom_call.1} parent=1 // loop_header_branch
      %19 = sbr.rel (%p17) target = $region8
    $region5: #{tpu_custom_call.1} parent=1 // loop_body
      %s21 = ssub.s32 %s16, 1
      %s22 = ssub.s32 %s16, 2
      %s29 = sadd.s32 1, %s24
      %p30 = scmp.ge.s32.totalorder %s29, 1
      %s31 = scalar_select %p30, 0, %s29
      %s32 = sadd.s32 1, %s23
      %s33 = scalar_select %p30, %s32, %s23
      %p34 = scmp.ge.s32.totalorder %s33, 2
      %s35 = scalar_select %p34, 0, %s33
      %s36 = ssub.s32 %s23, %s35
      %p37 = scmp.eq.s32.totalorder %s36, 0
      %s39 = sadd.s32 %s38, 1
      %s40 = scalar_select %p37, %s38, %s39
      %p43 = pneg %p37
      %p44 = scmp.eq.s32.totalorder %s16, 1
      %p45 = por %p43, %p44
      %p46 = scmp.ne.s32.totalorder %s38, %s41
      %p47 = scmp.eq.s32.totalorder %s16, 0
      %p48 = por %p46, %p47
      %p49 = scmp.ne.s32.totalorder %s38, %s41
      %p50 = scmp.eq.s32.totalorder %s21, 1
      %p51 = por %p49, %p50
      %p52 = scmp.ne.s32.totalorder %s41, %s42
      %p53 = scmp.eq.s32.totalorder %s21, 0
      %p54 = por %p52, %p53
      %p55 = scmp.ne.s32.totalorder %s41, %s42
      %p56 = scmp.eq.s32.totalorder %s22, 1
      %p57 = por %p55, %p56
      %p59 = scmp.ne.s32.totalorder %s42, %s58
      %p60 = scmp.eq.s32.totalorder %s22, 0
      %p61 = por %p59, %p60
      %s63 = sadd.s32 %s62, 1
      %p66 = scmp.eq.s32.totalorder %s16, 1
      %p67 = scmp.ne.s32.totalorder %s62, %s64
      %p68 = scmp.eq.s32.totalorder %s16, 0
      %p69 = por %p67, %p68
      %p70 = scmp.ne.s32.totalorder %s62, %s64
      %p71 = scmp.eq.s32.totalorder %s21, 1
      %p72 = por %p70, %p71
      %p73 = scmp.ne.s32.totalorder %s64, %s65
      %p74 = scmp.eq.s32.totalorder %s21, 0
      %p75 = por %p73, %p74
      %p76 = scmp.ne.s32.totalorder %s64, %s65
      %p77 = scmp.eq.s32.totalorder %s22, 1
      %p78 = por %p76, %p77
      %p80 = scmp.ne.s32.totalorder %s65, %s79
      %p81 = scmp.eq.s32.totalorder %s22, 0
      %p82 = por %p80, %p81
      %s84 = sadd.s32 %s83, 1
      %p87 = scmp.eq.s32.totalorder %s16, 1
      %p88 = scmp.ne.s32.totalorder %s83, %s85
      %p89 = scmp.eq.s32.totalorder %s16, 0
      %p90 = por %p88, %p89
      %p91 = scmp.ne.s32.totalorder %s83, %s85
      %p92 = scmp.eq.s32.totalorder %s21, 1
      %p93 = por %p91, %p92
      %p94 = scmp.ne.s32.totalorder %s85, %s86
      %p95 = scmp.eq.s32.totalorder %s21, 0
      %p96 = por %p94, %p95
      %p97 = scmp.ne.s32.totalorder %s85, %s86
      %p98 = scmp.eq.s32.totalorder %s22, 1
      %p99 = por %p97, %p98
      %p101 = scmp.ne.s32.totalorder %s86, %s100
      %p102 = scmp.eq.s32.totalorder %s22, 0
      %p103 = por %p101, %p102
      %s105 = sadd.s32 %s104, 1
      %p108 = scmp.eq.s32.totalorder %s16, 1
      %p109 = scmp.ne.s32.totalorder %s104, %s106
      %p110 = scmp.eq.s32.totalorder %s16, 0
      %p111 = por %p109, %p110
      %p112 = scmp.ne.s32.totalorder %s104, %s106
      %p113 = scmp.eq.s32.totalorder %s21, 1
      %p114 = por %p112, %p113
      %p115 = scmp.ne.s32.totalorder %s106, %s107
      %p116 = scmp.eq.s32.totalorder %s21, 0
      %p117 = por %p115, %p116
      %p118 = scmp.ne.s32.totalorder %s106, %s107
      %p119 = scmp.eq.s32.totalorder %s22, 1
      %p120 = por %p118, %p119
      %p122 = scmp.ne.s32.totalorder %s107, %s121
      %p123 = scmp.eq.s32.totalorder %s22, 0
      %p124 = por %p122, %p123
      %s126 = sadd.s32 %s125, 1
      %p129 = scmp.eq.s32.totalorder %s16, 1
      %p130 = scmp.ne.s32.totalorder %s125, %s127
      %p131 = scmp.eq.s32.totalorder %s16, 0
      %p132 = por %p130, %p131
      %p133 = scmp.ne.s32.totalorder %s125, %s127
      %p134 = scmp.eq.s32.totalorder %s21, 1
      %p135 = por %p133, %p134
      %p136 = scmp.ne.s32.totalorder %s127, %s128
      %p137 = scmp.eq.s32.totalorder %s21, 0
      %p138 = por %p136, %p137
      %p139 = scmp.ne.s32.totalorder %s127, %s128
      %p140 = scmp.eq.s32.totalorder %s22, 1
      %p141 = por %p139, %p140
      %p143 = scmp.ne.s32.totalorder %s128, %s142
      %p144 = scmp.eq.s32.totalorder %s22, 0
      %p145 = por %p143, %p144
      %s147 = sadd.s32 %s146, 1
      %p150 = scmp.eq.s32.totalorder %s16, 1
      %p151 = scmp.ne.s32.totalorder %s146, %s148
      %p152 = scmp.eq.s32.totalorder %s16, 0
      %p153 = por %p151, %p152
      %p154 = scmp.ne.s32.totalorder %s146, %s148
      %p155 = scmp.eq.s32.totalorder %s21, 1
      %p156 = por %p154, %p155
      %p157 = scmp.ne.s32.totalorder %s148, %s149
      %p158 = scmp.eq.s32.totalorder %s21, 0
      %p159 = por %p157, %p158
      %p160 = scmp.ne.s32.totalorder %s148, %s149
      %p161 = scmp.eq.s32.totalorder %s22, 1
      %p162 = por %p160, %p161
      %p164 = scmp.ne.s32.totalorder %s149, %s163
      %p165 = scmp.eq.s32.totalorder %s22, 0
      %p166 = por %p164, %p165
      %s167 = ssub.s32 %s23, %s35
      %s168 = ssub.s32 %s24, %s31
      %s169 = sor.u32 %s167, %s168
      %p170 = scmp.eq.s32.totalorder %s169, 0
      %s172 = sadd.s32 %s171, 1
      %s173 = scalar_select %p170, %s171, %s172
      %p176 = pneg %p170
      %p177 = scmp.eq.s32.totalorder %s16, 1
      %p178 = por %p176, %p177
      %p179 = scmp.ne.s32.totalorder %s171, %s174
      %p180 = scmp.eq.s32.totalorder %s16, 0
      %p181 = por %p179, %p180
      %p182 = scmp.ne.s32.totalorder %s171, %s174
      %p183 = scmp.eq.s32.totalorder %s21, 1
      %p184 = por %p182, %p183
      %p185 = scmp.ne.s32.totalorder %s174, %s175
      %p186 = scmp.eq.s32.totalorder %s21, 0
      %p187 = por %p185, %p186
      %p188 = scmp.ne.s32.totalorder %s174, %s175
      %p189 = scmp.eq.s32.totalorder %s22, 1
      %p190 = por %p188, %p189
      %p192 = scmp.ne.s32.totalorder %s175, %s191
      %p193 = scmp.eq.s32.totalorder %s22, 0
      %p194 = por %p192, %p193
      %p195 = scmp.le.s32.totalorder 1, %s16
      %p196 = scmp.lt.s32.totalorder %s16, 3
      %p197 = pnand %p195, %p196
      %p198 = pneg %p197
      // Predicated region
      $region9: #{tpu_custom_call.1} parent=5 // pred_check
        _
      $region10: #{tpu_custom_call.1} parent=5 // pred_check_branch
        %200 = sbr.rel (%p197) target = $region12
      $region11: #{tpu_custom_call.1} parent=5 // pred_region
        %s201 = ssub.s32 %s16, 1
        // Predicated region
        $region13: #{tpu_custom_call.1} parent=11 // pred_check
          %p202 = pneg %p75
        $region14: #{tpu_custom_call.1} parent=11 // pred_check_branch
          %204 = sbr.rel (%p202) target = $region16
        $region15: #{tpu_custom_call.1} parent=11 // pred_region
          _
        $region16: #{tpu_custom_call.1} parent=11 // pred_fallthru
          _
        // Predicated region
        $region17: #{tpu_custom_call.1} parent=11 // pred_check
          %p205 = pneg %p96
        $region18: #{tpu_custom_call.1} parent=11 // pred_check_branch
          %207 = sbr.rel (%p205) target = $region20
        $region19: #{tpu_custom_call.1} parent=11 // pred_region
          _
        $region20: #{tpu_custom_call.1} parent=11 // pred_fallthru
          _
        // Predicated region
        $region21: #{tpu_custom_call.1} parent=11 // pred_check
          %p208 = pneg %p117
        $region22: #{tpu_custom_call.1} parent=11 // pred_check_branch
          %210 = sbr.rel (%p208) target = $region24
        $region23: #{tpu_custom_call.1} parent=11 // pred_region
          _
        $region24: #{tpu_custom_call.1} parent=11 // pred_fallthru
          _
        // Predicated region
        $region25: #{tpu_custom_call.1} parent=11 // pred_check
          %p211 = pneg %p138
        $region26: #{tpu_custom_call.1} parent=11 // pred_check_branch
          %213 = sbr.rel (%p211) target = $region28
        $region27: #{tpu_custom_call.1} parent=11 // pred_region
          _
        $region28: #{tpu_custom_call.1} parent=11 // pred_fallthru
          _
        // Predicated region
        $region29: #{tpu_custom_call.1} parent=11 // pred_check
          %p214 = pneg %p159
        $region30: #{tpu_custom_call.1} parent=11 // pred_check_branch
          %216 = sbr.rel (%p214) target = $region32
        $region31: #{tpu_custom_call.1} parent=11 // pred_region
          _
        $region32: #{tpu_custom_call.1} parent=11 // pred_fallthru
          _
      $region12: #{tpu_custom_call.1} parent=5 // pred_fallthru
        _
      %p217 = scmp.lt.s32.totalorder %s16, 2
      // Predicated region
      $region33: #{tpu_custom_call.1} parent=5 // pred_check
        %p218 = pneg %p217
      $region34: #{tpu_custom_call.1} parent=5 // pred_check_branch
        %220 = sbr.rel (%p218) target = $region36
      $region35: #{tpu_custom_call.1} parent=5 // pred_region
        // Predicated region
        $region37: #{tpu_custom_call.1} parent=35 // pred_check
          %p221 = pneg %p48
        $region38: #{tpu_custom_call.1} parent=35 // pred_check_branch
          %223 = sbr.rel (%p221) target = $region40
        $region39: #{tpu_custom_call.1} parent=35 // pred_region
          %p224 = scmp.lt.s32.totalorder %s23, 1
          %s225 = scalar_select %p224, %s23, 1
          %s226 = smul.addr %s225, 2
          %s227 = smul.addr %s226, 8
          %s228 = scalar_lea.vmem %s0, %s227
        $region40: #{tpu_custom_call.1} parent=35 // pred_fallthru
          _
      $region36: #{tpu_custom_call.1} parent=5 // pred_fallthru
        _
      %p229 = scmp.le.s32.totalorder 1, %s16
      %p230 = scmp.lt.s32.totalorder %s16, 3
      %p231 = pnand %p229, %p230
      %p232 = pneg %p231
      // Predicated region
      $region41: #{tpu_custom_call.1} parent=5 // pred_check
        _
      $region42: #{tpu_custom_call.1} parent=5 // pred_check_branch
        %234 = sbr.rel (%p231) target = $region44
      $region43: #{tpu_custom_call.1} parent=5 // pred_region
        %s235 = ssub.s32 %s16, 1
        %p236 = scmp.lt.s32.totalorder %s25, 1
        %s237 = scalar_select %p236, %s25, 1
        %s238 = smul.addr %s237, 2
        %s239 = smul.addr %s238, 8
        %s240 = scalar_lea.vmem %s0, %s239
        %p241 = pneg %p54
        %p242 = pneg %p51
        %p243 = pneg %p75
        %p244 = pneg %p72
        %p245 = pneg %p96
        %p246 = pneg %p93
        %p247 = pneg %p117
        %p248 = pneg %p114
        %p249 = pneg %p138
        %p250 = pneg %p135
        %p251 = pneg %p159
        %p252 = pneg %p156
        %p253 = pneg %p187
        %p254 = pneg %p184
        %s255 = sand.u32 %s174, 1
        %s256 = scalar_lea.sflag [#allocation6], %s255
        %s257 = sand.u32 %s174, 1
        %s258 = smul.addr %s257, 16
        %s259 = scalar_lea.vmem [#allocation5], %s258
        %p260 = scmp.lt.s32.totalorder %s25, 1
        %s261 = scalar_select %p260, %s25, 1
        %s262 = smul.addr %s261, 2
        %s263 = smul.addr %s262, 8
        %s264 = scalar_lea.vmem %s0, %s263
        %p265 = scmp.eq.s32.totalorder %s26, 0
        // Predicated region
        $region45: #{tpu_custom_call.1} parent=43 // pred_check
          %p266 = pneg %p265
        $region46: #{tpu_custom_call.1} parent=43 // pred_check_branch
          %268 = sbr.rel (%p266) target = $region48
        $region47: #{tpu_custom_call.1} parent=43 // pred_region
          %v269 = vld [vmem:[%s3] sm:$0xff]
          %v270 = vld [vmem:[%s3 + $0x8] sm:$0xff]
          %v271 = vld [vmem:[%s3 + $0x10] sm:$0xff]
          %v272 = vld [vmem:[%s264] sm:$0xff]
          %v273 = vld [vmem:[%s264 + $0x8] sm:$0xff]
          %v274 = vld [vmem:[%s4] sm:$0xff]
          %v275 = vld [vmem:[%s4 + $0x8] sm:$0xff]
          %v276 = vld [vmem:[%s4 + $0x10] sm:$0xff]
          %278 = vset.pattern.permute.xlu0 0
          %279 = vperm.xlu0 %278, %v274
          %v280 = vpop.permute.xlu0 %279
          %283 = vset.pattern.permute.xlu0 0
          %284 = vperm.xlu0 %283, %v275
          %v285 = vpop.permute.xlu0 %284
          %288 = vset.pattern.permute.xlu0 0
          %289 = vperm.xlu0 %288, %v276
          %v290 = vpop.permute.xlu0 %289
          %vm292 = vcmask 130048
          %v294 = vsel %vm292, %v269, 0
          %v297 = vsel %vm292, %v270, 0
          %v300 = vsel %vm292, %v271, 0
          %302 = vmatprep.subr.mxu0 0.0
          %303 = vmatpush1.msra.mxu0 0.0
          %304 = vmatprep.subr.mxu0 0.0
          %305 = vmatpush1.msra.mxu0 0.0
          %306 = vmatprep.subr.mxu0 0.0
          %307 = vmatpush1.msra.mxu0 0.0
          %308 = vmatprep.subr.mxu0 0.0
          %309 = vmatpush1.msra.mxu0 0.0
          %310 = vmatprep.subr.mxu0 0.0
          %311 = vmatpush1.msra.mxu0 0.0
          %312 = vmatprep.subr.mxu0 0.0
          %313 = vmatpush1.msra.mxu0 0.0
          %314 = vmatprep.subr.mxu0 0.0
          %315 = vmatpush1.msra.mxu0 0.0
          %316 = vmatprep.subr.mxu0 0.0
          %317 = vmatpush1.msra.mxu0 0.0
          %318 = vmatprep.subr.mxu0 0.0
          %319 = vmatpush1.msra.mxu0 0.0
          %320 = vmatprep.subr.mxu0 0.0
          %321 = vmatpush1.msra.mxu0 0.0
          %322 = vmatprep.subr.mxu0 0.0
          %323 = vmatpush1.msra.mxu0 0.0
          %324 = vmatprep.subr.mxu0 0.0
          %325 = vmatpush1.msra.mxu0 0.0
          %326 = vmatprep.subr.mxu0 0.0
          %327 = vmatpush1.msra.mxu0 0.0
          %328 = vmatprep.subr.mxu0 0.0
          %329 = vmatpush1.msra.mxu0 0.0
          %330 = vmatprep.subr.mxu0 0.0
          %331 = vmatpush1.msra.mxu0 %v273
          %332 = vmatprep.subr.mxu0 0.0
          %333 = vmatpush1.msra.mxu0 %v272
          %334 = vmatprep.subr.mxu0 0.0
          %335 = vmatpush2.msra.mxu0 0.0
          %336 = vmatprep.subr.mxu0 0.0
          %337 = vmatpush2.msra.mxu0 0.0
          %338 = vmatprep.subr.mxu0 0.0
          %339 = vmatpush2.msra.mxu0 0.0
          %340 = vmatprep.subr.mxu0 0.0
          %341 = vmatpush2.msra.mxu0 0.0
          %342 = vmatprep.subr.mxu0 0.0
          %343 = vmatpush2.msra.mxu0 0.0
          %344 = vmatprep.subr.mxu0 0.0
          %345 = vmatpush2.msra.mxu0 0.0
          %346 = vmatprep.subr.mxu0 0.0
          %347 = vmatpush2.msra.mxu0 0.0
          %348 = vmatprep.subr.mxu0 0.0
          %349 = vmatpush2.msra.mxu0 0.0
          %350 = vmatprep.subr.mxu0 0.0
          %351 = vmatpush2.msra.mxu0 0.0
          %352 = vmatprep.subr.mxu0 0.0
          %353 = vmatpush2.msra.mxu0 0.0
          %354 = vmatprep.subr.mxu0 0.0
          %355 = vmatpush2.msra.mxu0 0.0
          %356 = vmatprep.subr.mxu0 0.0
          %357 = vmatpush2.msra.mxu0 0.0
          %358 = vmatprep.subr.mxu0 0.0
          %359 = vmatpush2.msra.mxu0 0.0
          %360 = vmatprep.subr.mxu0 0.0
          %361 = vmatpush2.msra.mxu0 0.0
          %362 = vmatprep.subr.mxu0 0.0
          %363 = vmatpush2.msra.mxu0 0.0
          %364 = vmatprep.subr.mxu0 0.0
          %365 = vmatpush2.msra.mxu0 0.0
          %366 = vmatprep.mubr.f32.mxu0 0.0
          %367 = vmatmul.mubr.f32.gmra.mxu0 %v294
          %v368 = vpop.f32.mrf.mxu0
          %v369 = vadd.f32 %v280, %v368
          %v370 = vpop.f32.mrf.mxu0
          %371 = vmatprep.mubr.f32.mxu0 0.0
          %372 = vmatmul.mubr.f32.gmra.mxu0 %v297
          %v373 = vpop.f32.mrf.mxu0
          %v374 = vadd.f32 %v285, %v373
          %v375 = vpop.f32.mrf.mxu0
          %376 = vmatprep.mubr.f32.mxu0 0.0
          %377 = vmatmul.mubr.f32.gmra.mxu0 %v300
          %v378 = vpop.f32.mrf.mxu0
          %v379 = vadd.f32 %v290, %v378
          %v380 = vpop.f32.mrf.mxu0
          %381 = vdwg.mxu0
          %382 = vst [vmem:[#allocation2] sm:$0xff] %v369
          %383 = vst [vmem:[#allocation3] sm:$0xff] %v374
          %384 = vst [vmem:[#allocation3 + $0x8] sm:$0xff] %v379
        $region48: #{tpu_custom_call.1} parent=43 // pred_fallthru
          _
        %s385 = smul.u32 %s26, 128
        %s386 = sshra.s32 %s385, 7
        %s387 = sand.u32 %s385, 127
        %s388 = scalar_lea.vmem %s264, %s386
        %v389 = vld [vmem:[%s388] sm:$0xff]
        %v390 = vld [vmem:[%s388 + $0x8] sm:$0xff]
        %v391 = vld [vmem:[%s1] sm:$0xff]
        %v392 = vld [vmem:[%s2] sm:$0xff]
        %394 = vset.pattern.permute.xlu0 0
        %395 = vperm.xlu0 %394, %v392
        %v396 = vpop.permute.xlu0 %395
        %vm398 = vcmask 130048
        %v400 = vsel %vm398, %v391, 0
        %402 = vmatprep.subr.mxu0 0.0
        %403 = vmatpush1.msra.mxu0 0.0
        %404 = vmatprep.subr.mxu0 0.0
        %405 = vmatpush1.msra.mxu0 0.0
        %406 = vmatprep.subr.mxu0 0.0
        %407 = vmatpush1.msra.mxu0 0.0
        %408 = vmatprep.subr.mxu0 0.0
        %409 = vmatpush1.msra.mxu0 0.0
        %410 = vmatprep.subr.mxu0 0.0
        %411 = vmatpush1.msra.mxu0 0.0
        %412 = vmatprep.subr.mxu0 0.0
        %413 = vmatpush1.msra.mxu0 0.0
        %414 = vmatprep.subr.mxu0 0.0
        %415 = vmatpush1.msra.mxu0 0.0
        %416 = vmatprep.subr.mxu0 0.0
        %417 = vmatpush1.msra.mxu0 0.0
        %418 = vmatprep.subr.mxu0 0.0
        %419 = vmatpush1.msra.mxu0 0.0
        %420 = vmatprep.subr.mxu0 0.0
        %421 = vmatpush1.msra.mxu0 0.0
        %422 = vmatprep.subr.mxu0 0.0
        %423 = vmatpush1.msra.mxu0 0.0
        %424 = vmatprep.subr.mxu0 0.0
        %425 = vmatpush1.msra.mxu0 0.0
        %426 = vmatprep.subr.mxu0 0.0
        %427 = vmatpush1.msra.mxu0 0.0
        %428 = vmatprep.subr.mxu0 0.0
        %429 = vmatpush1.msra.mxu0 0.0
        %430 = vmatprep.subr.mxu0 0.0
        %431 = vmatpush1.msra.mxu0 %v390
        %432 = vmatprep.subr.mxu0 0.0
        %433 = vmatpush1.msra.mxu0 %v389
        %434 = vmatprep.subr.mxu0 0.0
        %435 = vmatpush2.msra.mxu0 0.0
        %436 = vmatprep.subr.mxu0 0.0
        %437 = vmatpush2.msra.mxu0 0.0
        %438 = vmatprep.subr.mxu0 0.0
        %439 = vmatpush2.msra.mxu0 0.0
        %440 = vmatprep.subr.mxu0 0.0
        %441 = vmatpush2.msra.mxu0 0.0
        %442 = vmatprep.subr.mxu0 0.0
        %443 = vmatpush2.msra.mxu0 0.0
        %444 = vmatprep.subr.mxu0 0.0
        %445 = vmatpush2.msra.mxu0 0.0
        %446 = vmatprep.subr.mxu0 0.0
        %447 = vmatpush2.msra.mxu0 0.0
        %448 = vmatprep.subr.mxu0 0.0
        %449 = vmatpush2.msra.mxu0 0.0
        %450 = vmatprep.subr.mxu0 0.0
        %451 = vmatpush2.msra.mxu0 0.0
        %452 = vmatprep.subr.mxu0 0.0
        %453 = vmatpush2.msra.mxu0 0.0
        %454 = vmatprep.subr.mxu0 0.0
        %455 = vmatpush2.msra.mxu0 0.0
        %456 = vmatprep.subr.mxu0 0.0
        %457 = vmatpush2.msra.mxu0 0.0
        %458 = vmatprep.subr.mxu0 0.0
        %459 = vmatpush2.msra.mxu0 0.0
        %460 = vmatprep.subr.mxu0 0.0
        %461 = vmatpush2.msra.mxu0 0.0
        %462 = vmatprep.subr.mxu0 0.0
        %463 = vmatpush2.msra.mxu0 0.0
        %464 = vmatprep.subr.mxu0 0.0
        %465 = vmatpush2.msra.mxu0 0.0
        %466 = vmatprep.mubr.f32.mxu0 0.0
        %467 = vmatmul.mubr.f32.gmra.mxu0 %v400
        %v468 = vpop.f32.mrf.mxu0
        %v469 = vadd.f32 %v396, %v468
        %v470 = vpop.f32.mrf.mxu0
        %471 = vdwg.mxu0
        %v472 = vld [vmem:[#allocation2] sm:$0xff]
        %473 = vxpose.xlu0.b32.start [1/16] %v472, 128
        %474 = vxpose.xlu0.b32.cont [2/16] 0.0, 128
        %475 = vxpose.xlu0.b32.cont [3/16] 0.0, 128
        %476 = vxpose.xlu0.b32.cont [4/16] 0.0, 128
        %477 = vxpose.xlu0.b32.cont [5/16] 0.0, 128
        %478 = vxpose.xlu0.b32.cont [6/16] 0.0, 128
        %479 = vxpose.xlu0.b32.cont [7/16] 0.0, 128
        %480 = vxpose.xlu0.b32.cont [8/16] 0.0, 128
        %481 = vxpose.xlu0.b32.cont [9/16] 0.0, 128
        %482 = vxpose.xlu0.b32.cont [10/16] 0.0, 128
        %483 = vxpose.xlu0.b32.cont [11/16] 0.0, 128
        %484 = vxpose.xlu0.b32.cont [12/16] 0.0, 128
        %485 = vxpose.xlu0.b32.cont [13/16] 0.0, 128
        %486 = vxpose.xlu0.b32.cont [14/16] 0.0, 128
        %487 = vxpose.xlu0.b32.cont [15/16] 0.0, 128
        %488 = vxpose.xlu0.b32.end [16/16] 0.0, 128
        %v489 = vpop.trf.xlu0
        %v490 = vpop.trf.xlu0
        %v491 = vpop.trf.xlu0
        %v492 = vpop.trf.xlu0
        %v493 = vpop.trf.xlu0
        %v494 = vpop.trf.xlu0
        %v495 = vpop.trf.xlu0
        %v496 = vpop.trf.xlu0
        %v497 = vpop.trf.xlu0
        %v498 = vpop.trf.xlu0
        %v499 = vpop.trf.xlu0
        %v500 = vpop.trf.xlu0
        %v501 = vpop.trf.xlu0
        %v502 = vpop.trf.xlu0
        %v503 = vpop.trf.xlu0
        %v504 = vpop.trf.xlu0
        %vm505 = vcmask 64512
        %v507 = vsel %vm505, %v489, 0
        %v510 = vsel %vm505, %v490, 0
        %v513 = vsel %vm505, %v491, 0
        %v516 = vsel %vm505, %v492, 0
        %v519 = vsel %vm505, %v493, 0
        %v522 = vsel %vm505, %v494, 0
        %v525 = vsel %vm505, %v495, 0
        %v528 = vsel %vm505, %v496, 0
        %v531 = vsel %vm505, %v497, 0
        %v534 = vsel %vm505, %v498, 0
        %v537 = vsel %vm505, %v499, 0
        %v540 = vsel %vm505, %v500, 0
        %v543 = vsel %vm505, %v501, 0
        %v546 = vsel %vm505, %v502, 0
        %v549 = vsel %vm505, %v503, 0
        %v552 = vsel %vm505, %v504, 0
        %554 = vmatprep.subr.mxu0 0.0
        %555 = vmatpush1.msra.mxu0 0.0
        %556 = vmatprep.subr.mxu0 0.0
        %557 = vmatpush1.msra.mxu0 0.0
        %558 = vmatprep.subr.mxu0 0.0
        %559 = vmatpush1.msra.mxu0 0.0
        %560 = vmatprep.subr.mxu0 0.0
        %561 = vmatpush1.msra.mxu0 0.0
        %562 = vmatprep.subr.mxu0 0.0
        %563 = vmatpush1.msra.mxu0 0.0
        %564 = vmatprep.subr.mxu0 0.0
        %565 = vmatpush1.msra.mxu0 0.0
        %566 = vmatprep.subr.mxu0 0.0
        %567 = vmatpush1.msra.mxu0 0.0
        %568 = vmatprep.subr.mxu0 0.0
        %569 = vmatpush1.msra.mxu0 0.0
        %570 = vmatprep.subr.mxu0 0.0
        %571 = vmatpush1.msra.mxu0 0.0
        %572 = vmatprep.subr.mxu0 0.0
        %573 = vmatpush1.msra.mxu0 0.0
        %574 = vmatprep.subr.mxu0 0.0
        %575 = vmatpush1.msra.mxu0 0.0
        %576 = vmatprep.subr.mxu0 0.0
        %577 = vmatpush1.msra.mxu0 0.0
        %578 = vmatprep.subr.mxu0 0.0
        %579 = vmatpush1.msra.mxu0 0.0
        %580 = vmatprep.subr.mxu0 0.0
        %581 = vmatpush1.msra.mxu0 0.0
        %582 = vmatprep.subr.mxu0 0.0
        %583 = vmatpush1.msra.mxu0 0.0
        %584 = vmatprep.subr.mxu0 0.0
        %585 = vmatpush1.msra.mxu0 %v469
        %586 = vmatprep.subr.mxu0 0.0
        %587 = vmatpush2.msra.mxu0 0.0
        %588 = vmatprep.subr.mxu0 0.0
        %589 = vmatpush2.msra.mxu0 0.0
        %590 = vmatprep.subr.mxu0 0.0
        %591 = vmatpush2.msra.mxu0 0.0
        %592 = vmatprep.subr.mxu0 0.0
        %593 = vmatpush2.msra.mxu0 0.0
        %594 = vmatprep.subr.mxu0 0.0
        %595 = vmatpush2.msra.mxu0 0.0
        %596 = vmatprep.subr.mxu0 0.0
        %597 = vmatpush2.msra.mxu0 0.0
        %598 = vmatprep.subr.mxu0 0.0
        %599 = vmatpush2.msra.mxu0 0.0
        %600 = vmatprep.subr.mxu0 0.0
        %601 = vmatpush2.msra.mxu0 0.0
        %602 = vmatprep.subr.mxu0 0.0
        %603 = vmatpush2.msra.mxu0 0.0
        %604 = vmatprep.subr.mxu0 0.0
        %605 = vmatpush2.msra.mxu0 0.0
        %606 = vmatprep.subr.mxu0 0.0
        %607 = vmatpush2.msra.mxu0 0.0
        %608 = vmatprep.subr.mxu0 0.0
        %609 = vmatpush2.msra.mxu0 0.0
        %610 = vmatprep.subr.mxu0 0.0
        %611 = vmatpush2.msra.mxu0 0.0
        %612 = vmatprep.subr.mxu0 0.0
        %613 = vmatpush2.msra.mxu0 0.0
        %614 = vmatprep.subr.mxu0 0.0
        %615 = vmatpush2.msra.mxu0 0.0
        %616 = vmatprep.subr.mxu0 0.0
        %617 = vmatpush2.msra.mxu0 0.0
        %618 = vmatprep.mubr.f32.mxu0 0.0
        %619 = vmatmul.mubr.f32.gmra.mxu0 %v507
        %v620 = vpop.f32.mrf.mxu0
        %v621 = vadd.f32 0.0, %v620
        %v622 = vpop.f32.mrf.mxu0
        %623 = vmatprep.mubr.f32.mxu0 0.0
        %624 = vmatmul.mubr.f32.gmra.mxu0 %v510
        %v625 = vpop.f32.mrf.mxu0
        %v626 = vadd.f32 0.0, %v625
        %v627 = vpop.f32.mrf.mxu0
        %628 = vmatprep.mubr.f32.mxu0 0.0
        %629 = vmatmul.mubr.f32.gmra.mxu0 %v513
        %v630 = vpop.f32.mrf.mxu0
        %v631 = vadd.f32 0.0, %v630
        %v632 = vpop.f32.mrf.mxu0
        %633 = vmatprep.mubr.f32.mxu0 0.0
        %634 = vmatmul.mubr.f32.gmra.mxu0 %v516
        %v635 = vpop.f32.mrf.mxu0
        %v636 = vadd.f32 0.0, %v635
        %v637 = vpop.f32.mrf.mxu0
        %638 = vmatprep.mubr.f32.mxu0 0.0
        %639 = vmatmul.mubr.f32.gmra.mxu0 %v519
        %v640 = vpop.f32.mrf.mxu0
        %v641 = vadd.f32 0.0, %v640
        %v642 = vpop.f32.mrf.mxu0
        %643 = vmatprep.mubr.f32.mxu0 0.0
        %644 = vmatmul.mubr.f32.gmra.mxu0 %v522
        %v645 = vpop.f32.mrf.mxu0
        %v646 = vadd.f32 0.0, %v645
        %v647 = vpop.f32.mrf.mxu0
        %648 = vmatprep.mubr.f32.mxu0 0.0
        %649 = vmatmul.mubr.f32.gmra.mxu0 %v525
        %v650 = vpop.f32.mrf.mxu0
        %v651 = vadd.f32 0.0, %v650
        %v652 = vpop.f32.mrf.mxu0
        %653 = vmatprep.mubr.f32.mxu0 0.0
        %654 = vmatmul.mubr.f32.gmra.mxu0 %v528
        %v655 = vpop.f32.mrf.mxu0
        %v656 = vadd.f32 0.0, %v655
        %v657 = vpop.f32.mrf.mxu0
        %658 = vmatprep.mubr.f32.mxu0 0.0
        %659 = vmatmul.mubr.f32.gmra.mxu0 %v531
        %v660 = vpop.f32.mrf.mxu0
        %v661 = vadd.f32 0.0, %v660
        %v662 = vpop.f32.mrf.mxu0
        %663 = vmatprep.mubr.f32.mxu0 0.0
        %664 = vmatmul.mubr.f32.gmra.mxu0 %v534
        %v665 = vpop.f32.mrf.mxu0
        %v666 = vadd.f32 0.0, %v665
        %v667 = vpop.f32.mrf.mxu0
        %668 = vmatprep.mubr.f32.mxu0 0.0
        %669 = vmatmul.mubr.f32.gmra.mxu0 %v537
        %v670 = vpop.f32.mrf.mxu0
        %v671 = vadd.f32 0.0, %v670
        %v672 = vpop.f32.mrf.mxu0
        %673 = vmatprep.mubr.f32.mxu0 0.0
        %674 = vmatmul.mubr.f32.gmra.mxu0 %v540
        %v675 = vpop.f32.mrf.mxu0
        %v676 = vadd.f32 0.0, %v675
        %v677 = vpop.f32.mrf.mxu0
        %678 = vmatprep.mubr.f32.mxu0 0.0
        %679 = vmatmul.mubr.f32.gmra.mxu0 %v543
        %v680 = vpop.f32.mrf.mxu0
        %v681 = vadd.f32 0.0, %v680
        %v682 = vpop.f32.mrf.mxu0
        %683 = vmatprep.mubr.f32.mxu0 0.0
        %684 = vmatmul.mubr.f32.gmra.mxu0 %v546
        %v685 = vpop.f32.mrf.mxu0
        %v686 = vadd.f32 0.0, %v685
        %v687 = vpop.f32.mrf.mxu0
        %688 = vmatprep.mubr.f32.mxu0 0.0
        %689 = vmatmul.mubr.f32.gmra.mxu0 %v549
        %v690 = vpop.f32.mrf.mxu0
        %v691 = vadd.f32 0.0, %v690
        %v692 = vpop.f32.mrf.mxu0
        %693 = vmatprep.mubr.f32.mxu0 0.0
        %694 = vmatmul.mubr.f32.gmra.mxu0 %v552
        %v695 = vpop.f32.mrf.mxu0
        %v696 = vadd.f32 0.0, %v695
        %v697 = vpop.f32.mrf.mxu0
        %698 = vdwg.mxu0
        %v699 = vlaneseq
        %v700 = vshrl.u32 %v699, 7
        %v701 = vadd.s32 %v700, 8
        %v702 = vadd.s32 %v700, 16
        %v703 = vadd.s32 %v700, 24
        %v704 = vadd.s32 %v700, 32
        %v705 = vadd.s32 %v700, 40
        %v706 = vadd.s32 %v700, 48
        %v707 = vadd.s32 %v700, 56
        %v708 = vadd.s32 %v700, 64
        %v709 = vadd.s32 %v700, 72
        %v710 = vadd.s32 %v700, 80
        %v711 = vadd.s32 %v700, 88
        %v712 = vadd.s32 %v700, 96
        %v713 = vadd.s32 %v700, 104
        %v714 = vadd.s32 %v700, 112
        %v715 = vadd.s32 %v700, 120
        %vm716 = vcmp.lt.s32.totalorder %v700, 64
        %vm717 = vcmp.lt.s32.totalorder %v701, 64
        %vm718 = vcmp.lt.s32.totalorder %v702, 64
        %vm719 = vcmp.lt.s32.totalorder %v703, 64
        %vm720 = vcmp.lt.s32.totalorder %v704, 64
        %vm721 = vcmp.lt.s32.totalorder %v705, 64
        %vm722 = vcmp.lt.s32.totalorder %v706, 64
        %vm723 = vcmp.lt.s32.totalorder %v707, 64
        %vm724 = vcmp.lt.s32.totalorder %v708, 64
        %vm725 = vcmp.lt.s32.totalorder %v709, 64
        %vm726 = vcmp.lt.s32.totalorder %v710, 64
        %vm727 = vcmp.lt.s32.totalorder %v711, 64
        %vm728 = vcmp.lt.s32.totalorder %v712, 64
        %vm729 = vcmp.lt.s32.totalorder %v713, 64
        %vm730 = vcmp.lt.s32.totalorder %v714, 64
        %vm731 = vcmp.lt.s32.totalorder %v715, 64
        %v732 = vsel %vm716, %v621, -inf
        %v733 = vsel %vm717, %v626, -inf
        %v734 = vsel %vm718, %v631, -inf
        %v735 = vsel %vm719, %v636, -inf
        %v736 = vsel %vm720, %v641, -inf
        %v737 = vsel %vm721, %v646, -inf
        %v738 = vsel %vm722, %v651, -inf
        %v739 = vsel %vm723, %v656, -inf
        %v740 = vsel %vm724, %v661, -inf
        %v741 = vsel %vm725, %v666, -inf
        %v742 = vsel %vm726, %v671, -inf
        %v743 = vsel %vm727, %v676, -inf
        %v744 = vsel %vm728, %v681, -inf
        %v745 = vsel %vm729, %v686, -inf
        %v746 = vsel %vm730, %v691, -inf
        %v747 = vsel %vm731, %v696, -inf
        %v748 = vmax.f32 %v732, %v736
        %v749 = vmax.f32 %v733, %v737
        %v750 = vmax.f32 %v734, %v738
        %v751 = vmax.f32 %v735, %v739
        %v752 = vmax.f32 %v748, %v740
        %v753 = vmax.f32 %v749, %v741
        %v754 = vmax.f32 %v750, %v742
        %v755 = vmax.f32 %v751, %v743
        %v756 = vmax.f32 %v752, %v744
        %v757 = vmax.f32 %v753, %v745
        %v758 = vmax.f32 %v754, %v746
        %v759 = vmax.f32 %v755, %v747
        %v760 = vmax.f32 %v756, %v757
        %v761 = vmax.f32 %v758, %v759
        %v762 = vmax.f32 %v760, %v761
        %v763 = vrot.slane %v762, 4
        %v764 = vmax.f32 %v762, %v763
        %v765 = vrot.slane %v764, 2
        %v766 = vmax.f32 %v764, %v765
        %v767 = vrot.slane %v766, 1
        %v768 = vmax.f32 %v766, %v767
        %v769 = vsub.f32 %v732, %v768
        %v770 = vsub.f32 %v733, %v768
        %v771 = vsub.f32 %v734, %v768
        %v772 = vsub.f32 %v735, %v768
        %v773 = vsub.f32 %v736, %v768
        %v774 = vsub.f32 %v737, %v768
        %v775 = vsub.f32 %v738, %v768
        %v776 = vsub.f32 %v739, %v768
        %v777 = vsub.f32 %v740, %v768
        %v778 = vsub.f32 %v741, %v768
        %v779 = vsub.f32 %v742, %v768
        %v780 = vsub.f32 %v743, %v768
        %v781 = vsub.f32 %v744, %v768
        %v782 = vsub.f32 %v745, %v768
        %v783 = vsub.f32 %v746, %v768
        %v784 = vsub.f32 %v747, %v768
        %v785 = vmul.f32 %v769, 1.442695
        %v786 = vpow.pop %v785
        %v787 = vmul.f32 %v770, 1.442695
        %v788 = vpow.pop %v787
        %v789 = vmul.f32 %v771, 1.442695
        %v790 = vpow.pop %v789
        %v791 = vmul.f32 %v772, 1.442695
        %v792 = vpow.pop %v791
        %v793 = vmul.f32 %v773, 1.442695
        %v794 = vpow.pop %v793
        %v795 = vmul.f32 %v774, 1.442695
        %v796 = vpow.pop %v795
        %v797 = vmul.f32 %v775, 1.442695
        %v798 = vpow.pop %v797
        %v799 = vmul.f32 %v776, 1.442695
        %v800 = vpow.pop %v799
        %v801 = vmul.f32 %v777, 1.442695
        %v802 = vpow.pop %v801
        %v803 = vmul.f32 %v778, 1.442695
        %v804 = vpow.pop %v803
        %v805 = vmul.f32 %v779, 1.442695
        %v806 = vpow.pop %v805
        %v807 = vmul.f32 %v780, 1.442695
        %v808 = vpow.pop %v807
        %v809 = vmul.f32 %v781, 1.442695
        %v810 = vpow.pop %v809
        %v811 = vmul.f32 %v782, 1.442695
        %v812 = vpow.pop %v811
        %v813 = vmul.f32 %v783, 1.442695
        %v814 = vpow.pop %v813
        %v815 = vmul.f32 %v784, 1.442695
        %v816 = vpow.pop %v815
        %v817 = vadd.f32 %v786, %v788
        %v818 = vadd.f32 %v817, %v790
        %v819 = vadd.f32 %v818, %v792
        %v820 = vadd.f32 %v819, %v794
        %v821 = vadd.f32 %v820, %v796
        %v822 = vadd.f32 %v821, %v798
        %v823 = vadd.f32 %v822, %v800
        %v824 = vadd.f32 %v823, %v802
        %v825 = vadd.f32 %v824, %v804
        %v826 = vadd.f32 %v825, %v806
        %v827 = vadd.f32 %v826, %v808
        %v828 = vadd.f32 %v827, %v810
        %v829 = vadd.f32 %v828, %v812
        %v830 = vadd.f32 %v829, %v814
        %v831 = vadd.f32 %v830, %v816
        %v832 = vrot.slane %v831, 4
        %v833 = vadd.f32 %v831, %v832
        %v834 = vrot.slane %v833, 2
        %v835 = vadd.f32 %v833, %v834
        %v836 = vrot.slane %v835, 1
        %v837 = vadd.f32 %v835, %v836
        %v838 = vrcp.pop %v837
        %v839 = vld [vmem:[#allocation3] sm:$0xff]
        %v840 = vld [vmem:[#allocation3 + $0x8] sm:$0xff]
        %841 = vmatprep.subr.mxu0 0.0
        %842 = vmatpush1.msra.mxu0 %v816
        %843 = vmatprep.subr.mxu0 0.0
        %844 = vmatpush1.msra.mxu0 %v814
        %845 = vmatprep.subr.mxu0 0.0
        %846 = vmatpush1.msra.mxu0 %v812
        %847 = vmatprep.subr.mxu0 0.0
        %848 = vmatpush1.msra.mxu0 %v810
        %849 = vmatprep.subr.mxu0 0.0
        %850 = vmatpush1.msra.mxu0 %v808
        %851 = vmatprep.subr.mxu0 0.0
        %852 = vmatpush1.msra.mxu0 %v806
        %853 = vmatprep.subr.mxu0 0.0
        %854 = vmatpush1.msra.mxu0 %v804
        %855 = vmatprep.subr.mxu0 0.0
        %856 = vmatpush1.msra.mxu0 %v802
        %857 = vmatprep.subr.mxu0 0.0
        %858 = vmatpush1.msra.mxu0 %v800
        %859 = vmatprep.subr.mxu0 0.0
        %860 = vmatpush1.msra.mxu0 %v798
        %861 = vmatprep.subr.mxu0 0.0
        %862 = vmatpush1.msra.mxu0 %v796
        %863 = vmatprep.subr.mxu0 0.0
        %864 = vmatpush1.msra.mxu0 %v794
        %865 = vmatprep.subr.mxu0 0.0
        %866 = vmatpush1.msra.mxu0 %v792
        %867 = vmatprep.subr.mxu0 0.0
        %868 = vmatpush1.msra.mxu0 %v790
        %869 = vmatprep.subr.mxu0 0.0
        %870 = vmatpush1.msra.mxu0 %v788
        %871 = vmatprep.subr.mxu0 0.0
        %872 = vmatpush1.msra.mxu0 %v786
        %873 = vmatprep.subr.mxu0 0.0
        %874 = vmatpush2.msra.mxu0 0.0
        %875 = vmatprep.subr.mxu0 0.0
        %876 = vmatpush2.msra.mxu0 0.0
        %877 = vmatprep.subr.mxu0 0.0
        %878 = vmatpush2.msra.mxu0 0.0
        %879 = vmatprep.subr.mxu0 0.0
        %880 = vmatpush2.msra.mxu0 0.0
        %881 = vmatprep.subr.mxu0 0.0
        %882 = vmatpush2.msra.mxu0 0.0
        %883 = vmatprep.subr.mxu0 0.0
        %884 = vmatpush2.msra.mxu0 0.0
        %885 = vmatprep.subr.mxu0 0.0
        %886 = vmatpush2.msra.mxu0 0.0
        %887 = vmatprep.subr.mxu0 0.0
        %888 = vmatpush2.msra.mxu0 0.0
        %889 = vmatprep.subr.mxu0 0.0
        %890 = vmatpush2.msra.mxu0 0.0
        %891 = vmatprep.subr.mxu0 0.0
        %892 = vmatpush2.msra.mxu0 0.0
        %893 = vmatprep.subr.mxu0 0.0
        %894 = vmatpush2.msra.mxu0 0.0
        %895 = vmatprep.subr.mxu0 0.0
        %896 = vmatpush2.msra.mxu0 0.0
        %897 = vmatprep.subr.mxu0 0.0
        %898 = vmatpush2.msra.mxu0 0.0
        %899 = vmatprep.subr.mxu0 0.0
        %900 = vmatpush2.msra.mxu0 0.0
        %901 = vmatprep.subr.mxu0 0.0
        %902 = vmatpush2.msra.mxu0 0.0
        %903 = vmatprep.subr.mxu0 0.0
        %904 = vmatpush2.msra.mxu0 0.0
        %905 = vmatprep.mubr.f32.mxu0 0.0
        %906 = vmatmul.mubr.f32.gmra.mxu0 %v839
        %v907 = vpop.f32.mrf.mxu0
        %v908 = vadd.f32 0.0, %v907
        %v909 = vpop.f32.mrf.mxu0
        %910 = vmatprep.mubr.f32.mxu0 0.0
        %911 = vmatmul.mubr.f32.gmra.mxu0 %v840
        %v912 = vpop.f32.mrf.mxu0
        %v913 = vadd.f32 0.0, %v912
        %v914 = vpop.f32.mrf.mxu0
        %915 = vdwg.mxu0
        %v916 = vmul.f32 %v908, %v838
        %v917 = vmul.f32 %v913, %v838
        %s918 = sld [smem:[#allocation4]]
        %v919 = vstv %s918
        %v920 = vmul.f32 %v919, %v916
        %v921 = vmul.f32 %v919, %v917
        %v922 = vadd.f32 %v920, %v389
        %v923 = vadd.f32 %v921, %v390
        %924 = vst [vmem:[%s259] sm:$0xff] %v922
        %925 = vst [vmem:[%s259 + $0x8] sm:$0xff] %v923
        %s926 = sand.u32 %s174, 1
        %s927 = scalar_lea.sflag [#allocation6], %s926
        %s928 = sand.u32 %s174, 1
        %s929 = smul.addr %s928, 16
        %s930 = scalar_lea.vmem [#allocation5], %s929
        // Predicated region
        $region49: #{tpu_custom_call.1} parent=43 // pred_check
          %p931 = pneg %p184
        $region50: #{tpu_custom_call.1} parent=43 // pred_check_branch
          %933 = sbr.rel (%p931) target = $region52
        $region51: #{tpu_custom_call.1} parent=43 // pred_region
          %s935 = ssub.s32 256, 256
          %936 = vsyncadd %s927, %s935
          %s937 = smul.addr %s25, 2
          %s938 = sadd.s32 %s26, %s937
          %s939 = smul.addr %s938, 128
          %s940 = scalar_lea.hbm %s6, %s939
          %s941 = sshll.u32 %s930, 4
          %s942 = int_to_ptr.vmem [resolvable:$true] %s941
          %947 = dma.vmem_to_hbm [thread:$0]  %s942, 256, %s940, %s927, 128, 128, 8
        $region52: #{tpu_custom_call.1} parent=43 // pred_fallthru
          _
      $region44: #{tpu_custom_call.1} parent=5 // pred_fallthru
        _
      %p948 = scmp.le.s32.totalorder 2, %s16
      // Predicated region
      $region53: #{tpu_custom_call.1} parent=5 // pred_check
        %p949 = pneg %p948
      $region54: #{tpu_custom_call.1} parent=5 // pred_check_branch
        %951 = sbr.rel (%p949) target = $region56
      $region55: #{tpu_custom_call.1} parent=5 // pred_region
        %s952 = ssub.s32 %s16, 2
        // Predicated region
        $region57: #{tpu_custom_call.1} parent=55 // pred_check
          %p953 = pneg %p190
        $region58: #{tpu_custom_call.1} parent=55 // pred_check_branch
          %955 = sbr.rel (%p953) target = $region60
        $region59: #{tpu_custom_call.1} parent=55 // pred_region
          %s956 = sand.u32 %s175, 1
          %s957 = scalar_lea.sflag [#allocation6], %s956
          %s958 = sand.u32 %s175, 1
          %s959 = smul.addr %s958, 16
          %s960 = scalar_lea.vmem [#allocation5], %s959
          %961 = dma.done %s957, 256
        $region60: #{tpu_custom_call.1} parent=55 // pred_fallthru
          _
      $region56: #{tpu_custom_call.1} parent=5 // pred_fallthru
        _
    $region6: #{tpu_custom_call.1} parent=1 // loop_footer
      %s20 = sadd.s32 1, %s16
    $region7: #{tpu_custom_call.1} parent=1 // loop_footer_branch
      %15 = sbr.rel target = $region3
    $region8: #{tpu_custom_call.1} parent=1 // loop_exit
      _
    %962 = vsyncpa [#allocation6], 1
    %s963 = scalar_lea.sflag [#allocation6], 1
    %964 = vsyncpa %s963, 1

</llo_original>
